<compile_context>
chip_gen: v7x
topology: tpu7x:2x2x1
jax: 0.10.0
libtpu: 0.0.40
codegen_flags: <defaults>
</compile_context>

<pallas_src>
import functools

import jax
import jax.numpy as jnp
from jax.experimental import pallas as pl
from jax.experimental.pallas import tpu as pltpu


def _mse_kernel(pred_ref, tgt_ref, out_ref, *,
                t_tile, t_total, total_steps, steps_per_shard,
                inv_n, needs_tail_mask, has_overhang):
    """Per-shard normalized sum of squared differences.

    pred_ref / tgt_ref : (B, t_tile) VMEM tiles (tgt tile is channel 0 only)
    out_ref            : (1, 1) SMEM per-shard partial result (resident across
                         the reduction axis; acts as the accumulator)
    """
    j = pl.program_id(1)                       # reduction ("arbitrary") axis

    @pl.when(j == 0)
    def _():
        out_ref[0, 0] = jnp.float32(0.0)

    d = pred_ref[...].astype(jnp.float32) - tgt_ref[...].astype(jnp.float32)
    d2 = d * d

    gstep = pl.program_id(0) * steps_per_shard + j   # global block index

    if needs_tail_mask:
        is_tail = gstep == (total_steps - 1)
        tail = t_total - (total_steps - 1) * t_tile   # static Python int

        @pl.when(is_tail)
        def _():
            # Only the single final (partial) block needs masking: columns past
            # `tail` hold Pallas pad garbage (pred) or channel-1 spill (tgt).
            # NOTE: must stay a `where`-SELECT (not multiply-by-mask) so
            # NaN/Inf garbage cannot propagate.
            col = jax.lax.broadcasted_iota(jnp.int32, d2.shape, 1)
            out_ref[0, 0] += jnp.sum(jnp.where(col < tail, d2, jnp.float32(0.0)))

        not_tail = jnp.logical_not(is_tail)
        if has_overhang:
            # Overhang steps (duplicate, index-map-clamped blocks) contribute 0.
            not_tail = jnp.logical_and(not_tail, gstep < total_steps)

        @pl.when(not_tail)
        def _():
            out_ref[0, 0] += jnp.sum(d2)      # single XLU reduce per step
    else:
        if has_overhang:
            @pl.when(gstep < total_steps)
            def _():
                out_ref[0, 0] += jnp.sum(d2)
        else:
            out_ref[0, 0] += jnp.sum(d2)

    @pl.when(j == pl.num_programs(1) - 1)
    def _():
        # Fold the 1/n normalization into the final write (per-shard partials
        # are each normalized; the wrapper just sums them).
        out_ref[0, 0] = out_ref[0, 0] * jnp.float32(inv_n)


def _num_tensorcores():
    """2 only on v7x (2 TCs/chip); v5e/v6e are single-TC so sharding is waste."""
    try:
        kind = jax.devices()[0].device_kind.lower()
    except Exception:
        return 1
    return 2 if ("v7" in kind or "7x" in kind) else 1


def monaural_loss(model_output, targets, *, target_block_bytes=4 << 20,
                  force_num_shards=None):
    """Pallas TPU implementation of MonauralLoss.forward.

    model_output : (B, T)
    targets      : (B, C, T)
    returns scalar float32 mean((model_output - targets[:, 0, :])**2)
    """
    B, T = model_output.shape
    Bt, C, Tt = targets.shape
    assert Bt == B and Tt == T, "targets must be (B, C, T) matching (B, T) output"

    # Free (contiguous) reshape: channel 0 of batch b occupies columns [0, T)
    # of row b, so the column-indexed BlockSpec below reads only channel-0
    # bytes from HBM -- no separate slice/copy kernel.
    targets2d = targets.reshape(B, C * T)

    # --- tile sizing: ~target_block_bytes per (sublane-padded) input block ---
    itemsize = jnp.dtype(model_output.dtype).itemsize
    sub = max(8 * (4 // itemsize), 8)               # 8 for f32, 16 for bf16
    b_pad = ((B + sub - 1) // sub) * sub
    t_tile = max((target_block_bytes // (itemsize * b_pad)) // 128 * 128, 128)
    t_pad = ((T + 127) // 128) * 128
    t_tile = min(t_tile, t_pad)

    total_steps = pl.cdiv(T, t_tile)

    if force_num_shards is not None:
        num_shards = force_num_shards
    else:
        num_shards = _num_tensorcores()
    num_shards = max(1, min(num_shards, total_steps))

    steps_per_shard = pl.cdiv(total_steps, num_shards)
    has_overhang = (num_shards * steps_per_shard != total_steps)
    needs_tail_mask = (T % t_tile) != 0

    n_elems = B * T
    inv_n = 1.0 / float(n_elems)

    kernel = functools.partial(
        _mse_kernel,
        t_tile=t_tile, t_total=T, total_steps=total_steps,
        steps_per_shard=steps_per_shard, inv_n=inv_n,
        needs_tail_mask=needs_tail_mask, has_overhang=has_overhang)

    def col_block(s, j):
        g = s * steps_per_shard + j
        if has_overhang:
            # Clamp the (skipped) overhang step's DMA to the last real block so
            # it never reads out of bounds; its contribution is zeroed in-kernel.
            g = jnp.minimum(g, total_steps - 1)
        return (0, g)

    # Explicit VMEM budget: 2 inputs x 2 pipeline buffers x block (+ slack),
    # kept under ~48 MiB so it also fits v7x's 64 MiB physical VMEM.
    block_bytes = b_pad * t_tile * itemsize
    vmem_limit = int(min(4 * block_bytes + (4 << 20), 48 << 20))

    cost = pl.CostEstimate(
        flops=3 * n_elems,
        transcendentals=0,
        bytes_accessed=n_elems * itemsize
                       + n_elems * jnp.dtype(targets.dtype).itemsize
                       + num_shards * 4)

    partials = pl.pallas_call(
        kernel,
        out_shape=jax.ShapeDtypeStruct((num_shards, 1), jnp.float32),
        grid=(num_shards, steps_per_shard),
        in_specs=[
            pl.BlockSpec((B, t_tile), col_block),   # model_output time tile
            pl.BlockSpec((B, t_tile), col_block),   # targets channel-0 time tile
        ],
        out_specs=pl.BlockSpec((1, 1), lambda s, j: (s, 0),
                               memory_space=pltpu.SMEM),
        compiler_params=pltpu.CompilerParams(
            dimension_semantics=("parallel", "arbitrary"),
            vmem_limit_bytes=vmem_limit),
        cost_estimate=cost,
    )(model_output, targets2d)

    # Tiny epilogue: combine the (<=2) already-normalized per-shard partials.
    return jnp.sum(partials)


if __name__ == "__main__":
    key = jax.random.PRNGKey(0)
    k1, k2 = jax.random.split(key)

    # Small shapes consistent with the module: (B, T) output, (B, C, T) targets.
    B, C, T = 2, 2, 512
    model_output = jax.random.normal(k1, (B, T), dtype=jnp.float32)
    targets = jax.random.normal(k2, (B, C, T), dtype=jnp.float32)

    loss = jax.block_until_ready(monaural_loss(model_output, targets))
    ref = jnp.mean((model_output - targets[:, 0, :]) ** 2)
    assert jnp.allclose(loss, ref, rtol=1e-5, atol=1e-6), (loss, ref)

    # Multi-step + tail-mask path: non-tile-aligned T with deliberately tiny
    # (256-wide) tiles, single shard.
    T2 = 1000
    mo2 = jax.random.normal(k1, (B, T2), dtype=jnp.float32)
    tg2 = jax.random.normal(k2, (B, C, T2), dtype=jnp.float32)
    loss2 = jax.block_until_ready(
        monaural_loss(mo2, tg2, target_block_bytes=8 * 256 * 4,
                      force_num_shards=1))
    ref2 = jnp.mean((mo2 - tg2[:, 0, :]) ** 2)
    assert jnp.allclose(loss2, ref2, rtol=1e-5, atol=1e-6), (loss2, ref2)

    # 2-shard path with an ODD number of blocks (clamped overhang step) plus a
    # tail mask -- exercises the v7x split; still correct (sequential) on
    # single-TC chips.
    T3 = 1200
    mo3 = jax.random.normal(k1, (B, T3), dtype=jnp.float32)
    tg3 = jax.random.normal(k2, (B, C, T3), dtype=jnp.float32)
    loss3 = jax.block_until_ready(
        monaural_loss(mo3, tg3, target_block_bytes=8 * 256 * 4,
                      force_num_shards=2))
    ref3 = jnp.mean((mo3 - tg3[:, 0, :]) ** 2)
    assert jnp.allclose(loss3, ref3, rtol=1e-5, atol=1e-6), (loss3, ref3)

    print("KERNEL_OK")
</pallas_src>

<mosaic_0001>
module attributes {stable_mosaic.version = 11 : i64} {
  func.func @_mse_kernel(%arg0: i32, %arg1: i32, %arg2: memref<2x512xf32, #tpu.memory_space<vmem>>, %arg3: memref<2x512xf32, #tpu.memory_space<vmem>>, %arg4: memref<1x1xf32, #tpu.memory_space<smem>>) attributes {dimension_semantics = [#tpu.dimension_semantics<parallel>, #tpu.dimension_semantics<arbitrary>], iteration_bounds = array<i64: 1, 1>, scalar_prefetch = 0 : i64, scratch_operands = 0 : i64, tpu.core_type = #tpu.core_type<tc>, window_params = [{transform_indices = @transform_0, window_bounds = array<i64: 2, 512>}, {transform_indices = @transform_1, window_bounds = array<i64: 2, 512>}, {transform_indices = @transform_2, window_bounds = array<i64: 1, 1>}]} {
    %c0_i32 = arith.constant 0 : i32
    %0 = arith.cmpi eq, %arg1, %c0_i32 : i32
    %1 = arith.extui %0 : i1 to i32
    %c0_i32_0 = arith.constant 0 : i32
    %2 = arith.cmpi ne, %1, %c0_i32_0 : i32
    scf.if %2 {
      %cst_10 = arith.constant 0.000000e+00 : f32
      %c0_11 = arith.constant 0 : index
      %c0_12 = arith.constant 0 : index
      %17 = memref.load %arg4[%c0_11, %c0_12] : memref<1x1xf32, #tpu.memory_space<smem>>
      memref.store %cst_10, %arg4[%c0_11, %c0_12] : memref<1x1xf32, #tpu.memory_space<smem>>
    } else {
    }
    %c0 = arith.constant 0 : index
    %c0_1 = arith.constant 0 : index
    %3 = vector.load %arg2[%c0, %c0_1] : memref<2x512xf32, #tpu.memory_space<vmem>>, vector<2x512xf32>
    %c0_2 = arith.constant 0 : index
    %c0_3 = arith.constant 0 : index
    %4 = vector.load %arg3[%c0_2, %c0_3] : memref<2x512xf32, #tpu.memory_space<vmem>>, vector<2x512xf32>
    %5 = arith.subf %3, %4 : vector<2x512xf32>
    %6 = arith.mulf %5, %5 : vector<2x512xf32>
    %c0_4 = arith.constant 0 : index
    %c0_5 = arith.constant 0 : index
    %7 = memref.load %arg4[%c0_4, %c0_5] : memref<1x1xf32, #tpu.memory_space<smem>>
    %8 = vector.shape_cast %6 : vector<2x512xf32> to vector<1x2x512xf32>
    %cst = arith.constant dense<0.000000e+00> : vector<1xf32>
    %9 = vector.multi_reduction <add>, %8, %cst [1, 2] : vector<1x2x512xf32> to vector<1xf32>
    %10 = vector.shape_cast %9 : vector<1xf32> to vector<1x1x1xf32>
    %11 = vector.extract %10[0, 0, 0] : f32 from vector<1x1x1xf32>
    %12 = arith.addf %7, %11 : f32
    %c0_6 = arith.constant 0 : index
    %c0_7 = arith.constant 0 : index
    %13 = memref.load %arg4[%c0_6, %c0_7] : memref<1x1xf32, #tpu.memory_space<smem>>
    memref.store %12, %arg4[%c0_6, %c0_7] : memref<1x1xf32, #tpu.memory_space<smem>>
    %c0_i32_8 = arith.constant 0 : i32
    %14 = arith.cmpi eq, %arg1, %c0_i32_8 : i32
    %15 = arith.extui %14 : i1 to i32
    %c0_i32_9 = arith.constant 0 : i32
    %16 = arith.cmpi ne, %15, %c0_i32_9 : i32
    scf.if %16 {
      %c0_10 = arith.constant 0 : index
      %c0_11 = arith.constant 0 : index
      %17 = memref.load %arg4[%c0_10, %c0_11] : memref<1x1xf32, #tpu.memory_space<smem>>
      %cst_12 = arith.constant 9.765625E-4 : f32
      %18 = arith.mulf %17, %cst_12 : f32
      %c0_13 = arith.constant 0 : index
      %c0_14 = arith.constant 0 : index
      %19 = memref.load %arg4[%c0_13, %c0_14] : memref<1x1xf32, #tpu.memory_space<smem>>
      memref.store %18, %arg4[%c0_13, %c0_14] : memref<1x1xf32, #tpu.memory_space<smem>>
    } else {
    }
    return
  }
  func.func @transform_0(%arg0: i32, %arg1: i32) -> (i32, i32) {
    %c1_i32 = arith.constant 1 : i32
    %0 = arith.muli %arg0, %c1_i32 : i32
    %1 = arith.addi %0, %arg1 : i32
    %c0_i32 = arith.constant 0 : i32
    %c0_i32_0 = arith.constant 0 : i32
    return %c0_i32, %1 : i32, i32
  }
  func.func @transform_1(%arg0: i32, %arg1: i32) -> (i32, i32) {
    %c1_i32 = arith.constant 1 : i32
    %0 = arith.muli %arg0, %c1_i32 : i32
    %1 = arith.addi %0, %arg1 : i32
    %c0_i32 = arith.constant 0 : i32
    %c0_i32_0 = arith.constant 0 : i32
    return %c0_i32, %1 : i32, i32
  }
  func.func @transform_2(%arg0: i32, %arg1: i32) -> (i32, i32) {
    %c0_i32 = arith.constant 0 : i32
    %c0_i32_0 = arith.constant 0 : i32
    return %arg0, %c0_i32 : i32, i32
  }
}

</mosaic_0001>

<llo_original>
// kernel: tpu_custom_call.1
$region0: #{tpu_custom_call.1}
  #allocation0 [shape = 'u32[]', space=smem, size = 0x4, offset = 0x4, fixed_abs, tag = 'smem constant byte address 0x4 - core index']
  #allocation1 [shape = 'u32[144,128]{1,0:T(1,128)}', space=vmem, size = 0x12000, scoped, tag = 'internal scratch']
  %s0 = inlined_call_operand.hbm [shape: f32[2,512], index: 0, kind: input, shape index: {}]
  %s1 = inlined_call_operand.hbm [shape: f32[2,1024], index: 1, kind: input, shape index: {}]
  %s2 = inlined_call_operand.hbm [shape: f32[1,1], index: 2, kind: output, shape index: {}]
  %s3 = sld [smem:[#allocation0]]
  $region34: #{tpu_custom_call.1} parent=0
    _
  %s5 = ssub.s32 1, %s3
  %s6 = scalar_select 0, %s5, %s3
  $region1: #{tpu_custom_call.1} parent=0
    #allocation2 [shape = 'u8[4096]{0}', space=vmem, size = 0x1000, scoped, tag = 'input window, operand 0, single buffered']
    #allocation3 [shape = 's32[1]{0}', space=sflag, size = 0x4, scoped, tag = 'scoped memory for tpu_custom_call.1']
    #allocation4 [shape = 's32[1]{0}', space=sflag, size = 0x4, scoped, tag = 'scoped memory for tpu_custom_call.1']
    #allocation5 [shape = 'u8[4096]{0}', space=vmem, size = 0x1000, scoped, tag = 'input window, operand 1, single buffered']
    #allocation6 [shape = 's32[1]{0}', space=sflag, size = 0x4, scoped, tag = 'scoped memory for tpu_custom_call.1']
    #allocation7 [shape = 'u8[512]{0}', space=smem, size = 0x200, scoped, tag = 'output window, operand 0, single buffered']
    %7 = vsyncpa [#allocation3], 0
    %8 = vsyncpa [#allocation6], 0
    %9 = vsyncpa [#allocation4], 0
    // Predicated region
    $region2: #{tpu_custom_call.1} parent=1 // pred_check
      _
    $region3: #{tpu_custom_call.1} parent=1 // pred_check_branch
      %11 = sbr.rel (0) target = $region5
    $region4: #{tpu_custom_call.1} parent=1 // pred_region
      %s12 = sadd.s32 0, 0
      %s13 = smul.u32 4, %s12
      %s15 = ssub.s32 128, 128
      %16 = vsyncadd [#allocation3], %s15
      %s17 = smul.addr %s13, 32
      %s18 = scalar_lea.hbm %s0, %s17
      %s20 = sshll.u32 [#allocation2], 4
      %s21 = int_to_ptr.vmem [resolvable:$true] %s20
      %23 = dma.hbm_to_vmem [thread:$0]  %s18, 128, %s21, [#allocation3]
    $region5: #{tpu_custom_call.1} parent=1 // pred_fallthru
      _
    // Predicated region
    $region6: #{tpu_custom_call.1} parent=1 // pred_check
      _
    $region7: #{tpu_custom_call.1} parent=1 // pred_check_branch
      %25 = sbr.rel (0) target = $region9
    $region8: #{tpu_custom_call.1} parent=1 // pred_region
      %s26 = sadd.s32 0, 0
      %s27 = smul.u32 4, %s26
      %s29 = ssub.s32 128, 128
      %30 = vsyncadd [#allocation6], %s29
      %s31 = smul.addr %s27, 32
      %s32 = scalar_lea.hbm %s1, %s31
      %s34 = sshll.u32 [#allocation5], 4
      %s35 = int_to_ptr.vmem [resolvable:$true] %s34
      %37 = dma.hbm_to_vmem [thread:$0]  %s32, 128, %s35, [#allocation6]
    $region9: #{tpu_custom_call.1} parent=1 // pred_fallthru
      _
    // Predicated region
    $region10: #{tpu_custom_call.1} parent=1 // pred_check
      _
    $region11: #{tpu_custom_call.1} parent=1 // pred_check_branch
      %39 = sbr.rel (0) target = $region13
    $region12: #{tpu_custom_call.1} parent=1 // pred_region
      %40 = dma.done [#allocation3], 128
    $region13: #{tpu_custom_call.1} parent=1 // pred_fallthru
      _
    // Predicated region
    $region14: #{tpu_custom_call.1} parent=1 // pred_check
      _
    $region15: #{tpu_custom_call.1} parent=1 // pred_check_branch
      %42 = sbr.rel (0) target = $region17
    $region16: #{tpu_custom_call.1} parent=1 // pred_region
      %43 = dma.done [#allocation6], 128
    $region17: #{tpu_custom_call.1} parent=1 // pred_fallthru
      _
    %s44 = sadd.s32 0, 0
    %s45 = smul.u32 4, %s44
    %s46 = sadd.s32 0, 0
    %s47 = smul.u32 4, %s46
    %p48 = scmp.eq.s32.totalorder 0, 0
    // Predicated region
    $region18: #{tpu_custom_call.1} parent=1 // pred_check
      %p49 = pneg %p48
    $region19: #{tpu_custom_call.1} parent=1 // pred_check_branch
      %51 = sbr.rel (%p49) target = $region21
    $region20: #{tpu_custom_call.1} parent=1 // pred_region
      %s52 = scalar_lea.smem [#allocation7], 0
      %53 = sst [smem:[%s52]] 0.0
    $region21: #{tpu_custom_call.1} parent=1 // pred_fallthru
      _
    %v54 = vld [vmem:[#allocation2] sm:$0xff]
    %v55 = vld [vmem:[#allocation5] sm:$0xff]
    %v56 = vsub.f32 %v54, %v55
    %v57 = vmul.f32 %v56, %v56
    %s58 = sld [smem:[#allocation7]]
    %v60 = vcombine.high %v57, %v57
    %v62 = vunpack.c.l.s4 1983009808
    %v63 = vunpack.c.0.s8 %v62
    %v64 = vlaneseq
    %v65 = vshrl.u32 %v64, 7
    %v66 = vsub.s32 %v63, %v65
    %v67 = vrot.slane %v57, %v66
    %v69 = vunpack.c.l.s4 1983009808
    %v70 = vunpack.c.0.s8 %v69
    %v71 = vlaneseq
    %v72 = vshrl.u32 %v71, 7
    %v73 = vsub.s32 %v70, %v72
    %v74 = vrot.slane %v60, %v73
    %v75 = vcombine.high %v67, %v67
    %v76 = vcombine.high %v74, %v74
    %vm81 = vcmask 1041408
    %v82 = vsel %vm81, %v67, 0.0
    %v83 = vsel %vm81, %v75, 0.0
    %v84 = vadd.f32 %v82, %v83
    %v85 = vsel %vm81, %v74, 0.0
    %v86 = vadd.f32 %v84, %v85
    %v87 = vsel %vm81, %v76, 0.0
    %v88 = vadd.f32 %v86, %v87
    %89 = vadd.xlane.f32.xlu0 %v88
    %v90 = vpop.xlane.xlu0 %89
    %v91 = vrot.slane %v90, 4
    %v92 = vadd.f32 %v90, %v91
    %v93 = vrot.slane %v92, 2
    %v94 = vadd.f32 %v92, %v93
    %v95 = vrot.slane %v94, 1
    %v96 = vadd.f32 %v94, %v95
    %s97 = vtos %v96
    %s98 = sadd.f32 %s58, %s97
    %s99 = scalar_lea.smem [#allocation7], 0
    %100 = sst [smem:[%s99]] %s98
    // Predicated region
    $region22: #{tpu_custom_call.1} parent=1 // pred_check
      %p101 = pneg %p48
    $region23: #{tpu_custom_call.1} parent=1 // pred_check_branch
      %103 = sbr.rel (%p101) target = $region25
    $region24: #{tpu_custom_call.1} parent=1 // pred_region
      %s104 = sld [smem:[#allocation7]]
      %s105 = smul.f32 %s104, 0.0009765625
      %106 = sst [smem:[%s99]] %s105
    $region25: #{tpu_custom_call.1} parent=1 // pred_fallthru
      _
    // Predicated region
    $region26: #{tpu_custom_call.1} parent=1 // pred_check
      _
    $region27: #{tpu_custom_call.1} parent=1 // pred_check_branch
      %108 = sbr.rel (0) target = $region29
    $region28: #{tpu_custom_call.1} parent=1 // pred_region
      %s110 = ssub.s32 16, 16
      %111 = vsyncadd [#allocation4], %s110
      %114 = dma.smem_to_hbm [#allocation7], 16, %s2, [#allocation4]
    $region29: #{tpu_custom_call.1} parent=1 // pred_fallthru
      _
    // Predicated region
    $region30: #{tpu_custom_call.1} parent=1 // pred_check
      _
    $region31: #{tpu_custom_call.1} parent=1 // pred_check_branch
      %116 = sbr.rel (0) target = $region33
    $region32: #{tpu_custom_call.1} parent=1 // pred_region
      %117 = dma.done [#allocation4], 16
    $region33: #{tpu_custom_call.1} parent=1 // pred_fallthru
      _
    %118 = sfence
    %119 = vsyncpa [#allocation3], 1
    %120 = vsyncpa [#allocation6], 1
    %121 = vsyncpa [#allocation4], 1

</llo_original>
